<compile_context>
chip_gen: v7x
topology: tpu7x:2x2x1
jax: 0.10.0
libtpu: 0.0.40
codegen_flags: <defaults>
</compile_context>

<pallas_src>
import functools

import jax
import jax.numpy as jnp
from jax.experimental import pallas as pl
from jax.experimental.pallas import tpu as pltpu


def _focal_loss_kernel(logits_ref, target_ref, loss_ref, *,
                       alpha, gamma, ignore_index, n_rows):
    tn, c = logits_ref.shape
    x = logits_ref[...].astype(jnp.float32)              # (TN, C), cast in-kernel (VPU)
    tgt = target_ref[...]                                 # (TN, 1) int32

    # Numerically stable log-softmax pieces over the class axis.
    m = jnp.max(x, axis=1, keepdims=True)                 # (TN, 1)   XLU
    shifted = x - m                                        # (TN, C)
    e = jnp.exp(shifted)                                   # (TN, C)   EUP

    # Class-axis sums on the MXU (ones-vector matmul) instead of XLU lane
    # reductions: v6e/v7x have only 2 XLU units and the MXU is otherwise idle.
    # HIGHEST precision keeps ~f32 accuracy for the accumulations.
    ones_c = jnp.ones((c, 1), jnp.float32)
    sumexp = jnp.dot(e, ones_c, precision=jax.lax.Precision.HIGHEST,
                     preferred_element_type=jnp.float32)             # (TN, 1)
    logsumexp = jnp.log(sumexp)                                       # (TN, 1)

    # Gather-before-exp: pick the target column of `shifted` via one-hot select,
    # then all remaining math runs on (TN, 1) columns only.
    col = jax.lax.broadcasted_iota(jnp.int32, (tn, c), 1)
    sel = col == tgt
    gathered = jnp.dot(jnp.where(sel, shifted, 0.0), ones_c,
                       precision=jax.lax.Precision.HIGHEST,
                       preferred_element_type=jnp.float32)            # (TN, 1)
    # NOTE: for ignored / out-of-bounds rows `sel` may never match, so
    # gathered == 0 and logpt == -logsumexp: finite values, masked to zero below.
    logpt = gathered - logsumexp                                      # (TN, 1)
    pt = jnp.exp(logpt)                                               # (TN, 1)
    one_minus_pt = jnp.maximum(1.0 - pt, 0.0)

    # Specialize the focal power at trace time (gamma=2 -> one VPU multiply).
    g = float(gamma)
    if g == int(g) and 0 <= int(g) <= 8:
        gi = int(g)
        if gi == 0:
            focal_w = jnp.ones_like(one_minus_pt)
        else:
            focal_w = one_minus_pt
            for _ in range(gi - 1):
                focal_w = focal_w * one_minus_pt
    else:
        focal_w = one_minus_pt ** jnp.float32(g)

    focal = -1.0 * focal_w * logpt                                    # (TN, 1)

    # alpha weighting (float alpha: one-vs-others mode, matches
    # torch.where(target > 0, 1 - alpha, alpha)).
    if alpha is None:
        weighted = focal
    else:
        a = jnp.float32(alpha)
        weighted = focal * jnp.where(tgt > 0, 1.0 - a, a)
    # TODO(synk): per-class (iterable) alpha weights not implemented; float/None only.

    # Mask ignored rows and out-of-bounds rows of a ragged last block.
    row = pl.program_id(0) * tn + jax.lax.broadcasted_iota(jnp.int32, (tn, 1), 0)
    valid = jnp.logical_and(tgt != ignore_index, row < n_rows)
    block_sum = jnp.sum(jnp.where(valid, weighted, 0.0))

    # One dense, tile-aligned store per block (no lane-width-1 masked stores);
    # the wrapper reads partial[:, 0, 0].
    loss_ref[...] = jnp.broadcast_to(block_sum, loss_ref.shape)


def _round_up(x, m):
    return ((x + m - 1) // m) * m


def focal_loss(logits, targets, *, alpha=0.5, gamma=2.0,
               reduction="mean", ignore_index=-100, block_rows=None):
    """logits: (N, C) float (any float dtype), targets: (N,) int. Scalar loss."""
    if reduction not in ("mean", "sum"):
        raise NotImplementedError(f"reduction='{reduction}' not supported in this kernel")
    # TODO(synk): reduction='none' returns a dynamically-shaped (filtered) vector
    # in the PyTorch module; that has no static-shape Pallas equivalent.

    n, c = logits.shape
    itemsize = jnp.dtype(logits.dtype).itemsize

    targets_i32 = targets.astype(jnp.int32)
    # Valid-row count from the ORIGINAL targets (wrapper-side, fused by XLA).
    n_valid = jnp.sum((targets_i32 != ignore_index).astype(jnp.float32))

    # Row-tile sizing: count everything that lives in VMEM per row, not just the
    # double-buffered input blocks:
    #   2 x (TN,C) logits blocks (native dtype) ............ 2*C*itemsize
    #   2 x (TN,1) int32 target blocks, 128-lane padded ..... 2*512
    #   ~5 live (TN,C) f32/i32 temporaries .................. 5*C*4
    #   ~4 live (TN,1) f32 column temporaries, padded ....... 4*512
    bytes_per_row = 2 * c * itemsize + 2 * 512 + 5 * c * 4 + 4 * 512
    vmem_budget = 24 * 1024 * 1024        # estimate target; leaves headroom under the limit
    tn = (vmem_budget // bytes_per_row) // 8 * 8
    tn = max(8, min(tn, 32768))
    if block_rows is not None:            # testing / tuning override
        tn = max(8, (int(block_rows) // 8) * 8)
    tn = min(tn, _round_up(n, 8))
    num_blocks = pl.cdiv(n, tn)
    # TODO(synk): for vocab-scale C, add a class-axis grid dimension with online
    # logsumexp accumulation so TN does not collapse to a handful of rows.

    targets2d = targets_i32.reshape(n, 1)

    kernel = functools.partial(
        _focal_loss_kernel,
        alpha=alpha, gamma=gamma, ignore_index=ignore_index, n_rows=n)

    cost = pl.CostEstimate(
        flops=10 * n * c,
        transcendentals=n * (c + 2),
        bytes_accessed=n * c * itemsize + n * 4 + num_blocks * 8 * 128 * 4)

    partials = pl.pallas_call(
        kernel,
        grid=(num_blocks,),
        in_specs=[
            pl.BlockSpec((tn, c), lambda i: (i, 0)),   # logits tile (native dtype)
            pl.BlockSpec((tn, 1), lambda i: (i, 0)),   # targets tile
        ],
        out_shape=jax.ShapeDtypeStruct((num_blocks, 8, 128), jnp.float32),
        out_specs=pl.BlockSpec((1, 8, 128), lambda i: (i, 0, 0)),
        compiler_params=pltpu.CompilerParams(
            dimension_semantics=("parallel",),
            vmem_limit_bytes=48 * 1024 * 1024),
        cost_estimate=cost,
    )(logits, targets2d)

    total = jnp.sum(partials[:, 0, 0])
    if reduction == "sum":
        return total
    # "mean": torch.mean over the rows that survived the ignore_index filter.
    return total / jnp.maximum(n_valid, 1.0)
    # Note: if every row is ignored this returns 0, whereas torch.mean over an
    # empty tensor returns NaN.


def _focal_loss_ref(logits, targets, *, alpha, gamma, reduction, ignore_index):
    """Pure-JAX reference mirroring the PyTorch forward (float/None alpha)."""
    targets = targets.astype(jnp.int32)
    valid = targets != ignore_index
    logpt_all = jax.nn.log_softmax(logits.astype(jnp.float32), axis=1)
    pt_all = jnp.exp(logpt_all)
    safe_t = jnp.where(valid, targets, 0)
    logpt = jnp.take_along_axis(logpt_all, safe_t[:, None], axis=1)[:, 0]
    pt = jnp.take_along_axis(pt_all, safe_t[:, None], axis=1)[:, 0]
    focal = -1.0 * (1.0 - pt) ** gamma * logpt
    if alpha is None:
        weights = jnp.ones_like(focal)
    else:
        weights = jnp.where(targets > 0, 1.0 - alpha, alpha)
    tmp = jnp.where(valid, focal * weights, 0.0)
    if reduction == "sum":
        return jnp.sum(tmp)
    return jnp.sum(tmp) / jnp.maximum(jnp.sum(valid.astype(jnp.float32)), 1.0)


if __name__ == "__main__":
    N, C = 8, 16
    ALPHA, GAMMA, REDUCTION, IGNORE = 0.5, 2.0, "mean", -100

    key = jax.random.PRNGKey(0)
    k_logits, k_tgt, k_logits2, k_tgt2 = jax.random.split(key, 4)
    logits = jax.random.normal(k_logits, (N, C), dtype=jnp.float32)
    targets = jax.random.randint(k_tgt, (N,), 0, C, dtype=jnp.int32)
    targets = targets.at[3].set(IGNORE)   # exercise the ignore_index path

    # Tolerances: the class-axis sums run on the MXU; f32-path tolerance allows
    # for the (worst-case) bf16-pass rounding of the MXU accumulations.
    F32_RTOL, F32_ATOL = 5e-3, 1e-4

    # f32 path, mean reduction.
    loss = focal_loss(logits, targets, alpha=ALPHA, gamma=GAMMA,
                      reduction=REDUCTION, ignore_index=IGNORE)
    loss = jax.block_until_ready(loss)
    ref = _focal_loss_ref(logits, targets, alpha=ALPHA, gamma=GAMMA,
                          reduction=REDUCTION, ignore_index=IGNORE)
    assert jnp.allclose(loss, ref, rtol=F32_RTOL, atol=F32_ATOL), (loss, ref)

    # bf16 path: logits travel to the kernel in bf16 (half the HBM bytes).
    logits_bf16 = logits.astype(jnp.bfloat16)
    loss_bf16 = focal_loss(logits_bf16, targets, alpha=ALPHA, gamma=GAMMA,
                           reduction=REDUCTION, ignore_index=IGNORE)
    loss_bf16 = jax.block_until_ready(loss_bf16)
    ref_bf16 = _focal_loss_ref(logits_bf16.astype(jnp.float32), targets,
                               alpha=ALPHA, gamma=GAMMA,
                               reduction=REDUCTION, ignore_index=IGNORE)
    assert jnp.allclose(loss_bf16, ref_bf16, rtol=5e-2, atol=1e-3), (loss_bf16, ref_bf16)

    # "sum" reduction path.
    loss_sum = focal_loss(logits, targets, alpha=ALPHA, gamma=GAMMA,
                          reduction="sum", ignore_index=IGNORE)
    loss_sum = jax.block_until_ready(loss_sum)
    ref_sum = _focal_loss_ref(logits, targets, alpha=ALPHA, gamma=GAMMA,
                              reduction="sum", ignore_index=IGNORE)
    assert jnp.allclose(loss_sum, ref_sum, rtol=F32_RTOL, atol=F32_ATOL), (loss_sum, ref_sum)

    # Multi-block + ragged-last-block path (forced 8-row tiles, N=30 -> 4 blocks),
    # alpha=None and non-integer gamma to exercise those branches.
    N2 = 30
    logits2 = jax.random.normal(k_logits2, (N2, C), dtype=jnp.float32)
    targets2 = jax.random.randint(k_tgt2, (N2,), 0, C, dtype=jnp.int32)
    targets2 = targets2.at[5].set(IGNORE)
    loss_mb = focal_loss(logits2, targets2, alpha=None, gamma=1.5,
                         reduction="mean", ignore_index=IGNORE, block_rows=8)
    loss_mb = jax.block_until_ready(loss_mb)
    ref_mb = _focal_loss_ref(logits2, targets2, alpha=None, gamma=1.5,
                             reduction="mean", ignore_index=IGNORE)
    assert jnp.allclose(loss_mb, ref_mb, rtol=F32_RTOL, atol=F32_ATOL), (loss_mb, ref_mb)

    print("KERNEL_OK")
</pallas_src>

<mosaic_0001>
module attributes {stable_mosaic.version = 11 : i64} {
  func.func @_focal_loss_kernel(%arg0: i32, %arg1: memref<8x16xf32, #tpu.memory_space<vmem>>, %arg2: memref<8x1xi32, #tpu.memory_space<vmem>>, %arg3: memref<1x8x128xf32, #tpu.memory_space<vmem>>) attributes {dimension_semantics = [#tpu.dimension_semantics<parallel>], iteration_bounds = array<i64: 1>, scalar_prefetch = 0 : i64, scratch_operands = 0 : i64, tpu.core_type = #tpu.core_type<tc>, window_params = [{transform_indices = @transform_0, window_bounds = array<i64: 8, 16>}, {transform_indices = @transform_1, window_bounds = array<i64: 8, 1>}, {transform_indices = @transform_2, window_bounds = array<i64: 1, 8, 128>}]} {
    %c0 = arith.constant 0 : index
    %c0_0 = arith.constant 0 : index
    %0 = vector.load %arg1[%c0, %c0_0] : memref<8x16xf32, #tpu.memory_space<vmem>>, vector<8x16xf32>
    %c0_1 = arith.constant 0 : index
    %c0_2 = arith.constant 0 : index
    %1 = vector.load %arg2[%c0_1, %c0_2] : memref<8x1xi32, #tpu.memory_space<vmem>>, vector<8x1xi32>
    %cst = arith.constant dense<0xFF800000> : vector<8xf32>
    %2 = vector.multi_reduction <maximumf>, %0, %cst [1] : vector<8x16xf32> to vector<8xf32>
    %3 = vector.shape_cast %2 : vector<8xf32> to vector<8x1xf32>
    %4 = vector.broadcast %3 : vector<8x1xf32> to vector<8x16xf32>
    %5 = arith.subf %0, %4 : vector<8x16xf32>
    %6 = math.exp %5 : vector<8x16xf32>
    %cst_3 = arith.constant 1.000000e+00 : f32
    %7 = vector.broadcast %cst_3 : f32 to vector<16x1xf32>
    %cst_4 = arith.constant dense<0.000000e+00> : vector<8x1xf32>
    %8 = tpu.matmul %6, %7, %cst_4 {dimension_numbers = #tpu.dot_dimension_numbers<[1], [0], [0], [1], [0, 0, 1, 1], [], []>, precision = #tpu.contract_precision<fp32>} : vector<8x16xf32>, vector<16x1xf32>, vector<8x1xf32> -> vector<8x1xf32>
    %9 = math.log %8 : vector<8x1xf32>
    %10 = tpu.iota {dimensions = array<i32: 1>} : vector<8x16xi32>
    %11 = vector.broadcast %1 : vector<8x1xi32> to vector<8x16xi32>
    %12 = arith.cmpi eq, %10, %11 : vector<8x16xi32>
    %cst_5 = arith.constant 0.000000e+00 : f32
    %13 = vector.broadcast %cst_5 : f32 to vector<8x16xf32>
    %14 = arith.select %12, %5, %13 : vector<8x16xi1>, vector<8x16xf32>
    %cst_6 = arith.constant dense<0.000000e+00> : vector<8x1xf32>
    %15 = tpu.matmul %14, %7, %cst_6 {dimension_numbers = #tpu.dot_dimension_numbers<[1], [0], [0], [1], [0, 0, 1, 1], [], []>, precision = #tpu.contract_precision<fp32>} : vector<8x16xf32>, vector<16x1xf32>, vector<8x1xf32> -> vector<8x1xf32>
    %16 = arith.subf %15, %9 : vector<8x1xf32>
    %17 = math.exp %16 : vector<8x1xf32>
    %cst_7 = arith.constant 1.000000e+00 : f32
    %18 = vector.broadcast %cst_7 : f32 to vector<8x1xf32>
    %19 = arith.subf %18, %17 : vector<8x1xf32>
    %cst_8 = arith.constant 0.000000e+00 : f32
    %20 = vector.broadcast %cst_8 : f32 to vector<8x1xf32>
    %21 = arith.maximumf %19, %20 : vector<8x1xf32>
    %22 = arith.mulf %21, %21 : vector<8x1xf32>
    %cst_9 = arith.constant -1.000000e+00 : f32
    %23 = vector.broadcast %cst_9 : f32 to vector<8x1xf32>
    %24 = arith.mulf %23, %22 : vector<8x1xf32>
    %25 = arith.mulf %24, %16 : vector<8x1xf32>
    %c0_i32 = arith.constant 0 : i32
    %26 = vector.broadcast %c0_i32 : i32 to vector<8x1xi32>
    %27 = arith.cmpi sgt, %1, %26 : vector<8x1xi32>
    %cst_10 = arith.constant 1.000000e+00 : f32
    %cst_11 = arith.constant 5.000000e-01 : f32
    %28 = arith.subf %cst_10, %cst_11 : f32
    %cst_12 = arith.constant 5.000000e-01 : f32
    %29 = vector.broadcast %28 : f32 to vector<8x1xf32>
    %30 = vector.broadcast %cst_12 : f32 to vector<8x1xf32>
    %31 = arith.select %27, %29, %30 : vector<8x1xi1>, vector<8x1xf32>
    %32 = arith.mulf %25, %31 : vector<8x1xf32>
    %c8_i32 = arith.constant 8 : i32
    %33 = arith.muli %arg0, %c8_i32 : i32
    %34 = tpu.iota {dimensions = array<i32: 0>} : vector<8x1xi32>
    %35 = vector.broadcast %33 : i32 to vector<8x1xi32>
    %36 = arith.addi %35, %34 : vector<8x1xi32>
    %c-100_i32 = arith.constant -100 : i32
    %37 = vector.broadcast %c-100_i32 : i32 to vector<8x1xi32>
    %38 = arith.cmpi ne, %1, %37 : vector<8x1xi32>
    %c8_i32_13 = arith.constant 8 : i32
    %39 = vector.broadcast %c8_i32_13 : i32 to vector<8x1xi32>
    %40 = arith.cmpi slt, %36, %39 : vector<8x1xi32>
    %41 = arith.andi %38, %40 : vector<8x1xi1>
    %cst_14 = arith.constant 0.000000e+00 : f32
    %42 = vector.broadcast %cst_14 : f32 to vector<8x1xf32>
    %43 = arith.select %41, %32, %42 : vector<8x1xi1>, vector<8x1xf32>
    %44 = vector.shape_cast %43 : vector<8x1xf32> to vector<1x8x1xf32>
    %cst_15 = arith.constant dense<0.000000e+00> : vector<1xf32>
    %45 = vector.multi_reduction <add>, %44, %cst_15 [1, 2] : vector<1x8x1xf32> to vector<1xf32>
    %46 = vector.shape_cast %45 : vector<1xf32> to vector<1x1x1xf32>
    %47 = vector.extract %46[0, 0, 0] : f32 from vector<1x1x1xf32>
    %48 = vector.broadcast %47 : f32 to vector<1x8x128xf32>
    %c0_16 = arith.constant 0 : index
    %c0_17 = arith.constant 0 : index
    %c0_18 = arith.constant 0 : index
    %49 = vector.load %arg3[%c0_16, %c0_17, %c0_18] : memref<1x8x128xf32, #tpu.memory_space<vmem>>, vector<1x8x128xf32>
    tpu.vector_store %arg3[%c0_16, %c0_17, %c0_18], %48 {strides = array<i32>} : memref<1x8x128xf32, #tpu.memory_space<vmem>>, vector<1x8x128xf32>,
    return
  }
  func.func @transform_0(%arg0: i32) -> (i32, i32) {
    %c0_i32 = arith.constant 0 : i32
    %c0_i32_0 = arith.constant 0 : i32
    return %arg0, %c0_i32 : i32, i32
  }
  func.func @transform_1(%arg0: i32) -> (i32, i32) {
    %c0_i32 = arith.constant 0 : i32
    %c0_i32_0 = arith.constant 0 : i32
    return %arg0, %c0_i32 : i32, i32
  }
  func.func @transform_2(%arg0: i32) -> (i32, i32, i32) {
    %c0_i32 = arith.constant 0 : i32
    %c0_i32_0 = arith.constant 0 : i32
    %c0_i32_1 = arith.constant 0 : i32
    return %arg0, %c0_i32, %c0_i32_0 : i32, i32, i32
  }
}

</mosaic_0001>

<llo_original>
// kernel: tpu_custom_call.1
$region0: #{tpu_custom_call.1}
  #allocation0 [shape = 'u32[]', space=smem, size = 0x4, offset = 0x4, fixed_abs, tag = 'smem constant byte address 0x4 - core index']
  #allocation1 [shape = 'u32[144,128]{1,0:T(1,128)}', space=vmem, size = 0x12000, scoped, tag = 'internal scratch']
  %s0 = inlined_call_operand.vmem [shape: f32[8,16], index: 0, kind: input, shape index: {}]
  %s1 = inlined_call_operand.vmem [shape: s32[8,1], index: 1, kind: input, shape index: {}]
  %s2 = inlined_call_operand.hbm [shape: f32[1,8,128], index: 2, kind: output, shape index: {}]
  %s3 = sld [smem:[#allocation0]]
  $region18: #{tpu_custom_call.1} parent=0
    _
  %s5 = ssub.s32 1, %s3
  %s6 = scalar_select 0, %s5, %s3
  $region1: #{tpu_custom_call.1} parent=0
    #allocation2 [shape = 'u8[4096]{0}', space=vmem, size = 0x1000, scoped, tag = 'output window, operand 0, single buffered']
    #allocation3 [shape = 's32[1]{0}', space=sflag, size = 0x4, scoped, tag = 'scoped memory for tpu_custom_call.1']
    %7 = vsyncpa [#allocation3], 0
    // Predicated region
    $region2: #{tpu_custom_call.1} parent=1 // pred_check
      _
    $region3: #{tpu_custom_call.1} parent=1 // pred_check_branch
      %9 = sbr.rel (0) target = $region5
    $region4: #{tpu_custom_call.1} parent=1 // pred_region
      _
    $region5: #{tpu_custom_call.1} parent=1 // pred_fallthru
      _
    // Predicated region
    $region6: #{tpu_custom_call.1} parent=1 // pred_check
      _
    $region7: #{tpu_custom_call.1} parent=1 // pred_check_branch
      %11 = sbr.rel (0) target = $region9
    $region8: #{tpu_custom_call.1} parent=1 // pred_region
      _
    $region9: #{tpu_custom_call.1} parent=1 // pred_fallthru
      _
    %v12 = vld [vmem:[%s0] sm:$0xff]
    %v13 = vld [vmem:[%s1] sm:$0xff]
    %vm14 = vcmask 130048
    %v15 = vsel %vm14, %v12, -inf
    %16 = vmax.xlane.f32.xlu0 %v15
    %v17 = vpop.xlane.xlu0 %16
    %v18 = vsub.f32 %v12, %v17
    %v19 = vmul.f32 %v18, 1.442695
    %v20 = vpow.pop %v19
    %v22 = vsel %vm14, %v20, 0
    %24 = vmatprep.subr.mxu0 0.0
    %25 = vmatpush1.msra.mxu0 1.0
    %26 = vmatprep.subr.mxu0 0.0
    %27 = vmatpush1.msra.mxu0 1.0
    %28 = vmatprep.subr.mxu0 0.0
    %29 = vmatpush1.msra.mxu0 0.0
    %30 = vmatprep.subr.mxu0 0.0
    %31 = vmatpush1.msra.mxu0 0.0
    %32 = vmatprep.subr.mxu0 0.0
    %33 = vmatpush1.msra.mxu0 0.0
    %34 = vmatprep.subr.mxu0 0.0
    %35 = vmatpush1.msra.mxu0 0.0
    %36 = vmatprep.subr.mxu0 0.0
    %37 = vmatpush1.msra.mxu0 0.0
    %38 = vmatprep.subr.mxu0 0.0
    %39 = vmatpush1.msra.mxu0 0.0
    %40 = vmatprep.subr.mxu0 0.0
    %41 = vmatpush1.msra.mxu0 0.0
    %42 = vmatprep.subr.mxu0 0.0
    %43 = vmatpush1.msra.mxu0 0.0
    %44 = vmatprep.subr.mxu0 0.0
    %45 = vmatpush1.msra.mxu0 0.0
    %46 = vmatprep.subr.mxu0 0.0
    %47 = vmatpush1.msra.mxu0 0.0
    %48 = vmatprep.subr.mxu0 0.0
    %49 = vmatpush1.msra.mxu0 0.0
    %50 = vmatprep.subr.mxu0 0.0
    %51 = vmatpush1.msra.mxu0 0.0
    %52 = vmatprep.subr.mxu0 0.0
    %53 = vmatpush1.msra.mxu0 0.0
    %54 = vmatprep.subr.mxu0 0.0
    %55 = vmatpush1.msra.mxu0 0.0
    %56 = vmatprep.subr.mxu0 0.0
    %57 = vmatpush1.msra.mxu0 0.0
    %58 = vmatprep.subr.mxu0 0.0
    %59 = vmatpush1.msra.mxu0 0.0
    %60 = vmatprep.subr.mxu0 0.0
    %61 = vmatpush1.msra.mxu0 0.0
    %62 = vmatprep.subr.mxu0 0.0
    %63 = vmatpush1.msra.mxu0 0.0
    %64 = vmatprep.subr.mxu0 0.0
    %65 = vmatpush1.msra.mxu0 0.0
    %66 = vmatprep.subr.mxu0 0.0
    %67 = vmatpush1.msra.mxu0 0.0
    %68 = vmatprep.subr.mxu0 0.0
    %69 = vmatpush1.msra.mxu0 0.0
    %70 = vmatprep.subr.mxu0 0.0
    %71 = vmatpush1.msra.mxu0 0.0
    %72 = vmatprep.subr.mxu0 0.0
    %73 = vmatpush1.msra.mxu0 0.0
    %74 = vmatprep.subr.mxu0 0.0
    %75 = vmatpush1.msra.mxu0 0.0
    %76 = vmatprep.subr.mxu0 0.0
    %77 = vmatpush1.msra.mxu0 0.0
    %78 = vmatprep.subr.mxu0 0.0
    %79 = vmatpush1.msra.mxu0 0.0
    %80 = vmatprep.subr.mxu0 0.0
    %81 = vmatpush1.msra.mxu0 0.0
    %82 = vmatprep.subr.mxu0 0.0
    %83 = vmatpush1.msra.mxu0 0.0
    %84 = vmatprep.subr.mxu0 0.0
    %85 = vmatpush1.msra.mxu0 0.0
    %86 = vmatprep.subr.mxu0 0.0
    %87 = vmatpush1.msra.mxu0 0.0
    %88 = vmatprep.mubr.f32.mxu0 0.0
    %v89 = vand.u32 %v22, 4294901760
    %v90 = vsub.f32 %v22, %v89
    %v91 = vand.u32 %v90, 4294901760
    %v92 = vsub.f32 %v90, %v91
    %v93 = vand.u32 %v92, 4294901760
    %94 = vmatmul.mubr.f32.gmra.mrb[0].mxu0 %v93
    %v95 = vpop.f32.mrb[0].mxu0
    %v96 = vadd.f32 0.0, %v95
    %v97 = vpop.f32.mrb[0].mxu0
    %98 = vdwg.mxu0
    %99 = vmatprep.subr.mxu0 0.0
    %100 = vmatpush1.msra.mxu0 0.0
    %101 = vmatprep.subr.mxu0 0.0
    %102 = vmatpush1.msra.mxu0 0.0
    %103 = vmatprep.subr.mxu0 0.0
    %104 = vmatpush1.msra.mxu0 0.0
    %105 = vmatprep.subr.mxu0 0.0
    %106 = vmatpush1.msra.mxu0 0.0
    %107 = vmatprep.subr.mxu0 0.0
    %108 = vmatpush1.msra.mxu0 0.0
    %109 = vmatprep.subr.mxu0 0.0
    %110 = vmatpush1.msra.mxu0 0.0
    %111 = vmatprep.subr.mxu0 0.0
    %112 = vmatpush1.msra.mxu0 0.0
    %113 = vmatprep.subr.mxu0 0.0
    %114 = vmatpush1.msra.mxu0 0.0
    %115 = vmatprep.subr.mxu0 0.0
    %116 = vmatpush1.msra.mxu0 0.0
    %117 = vmatprep.subr.mxu0 0.0
    %118 = vmatpush1.msra.mxu0 0.0
    %119 = vmatprep.subr.mxu0 0.0
    %120 = vmatpush1.msra.mxu0 0.0
    %121 = vmatprep.subr.mxu0 0.0
    %122 = vmatpush1.msra.mxu0 0.0
    %123 = vmatprep.subr.mxu0 0.0
    %124 = vmatpush1.msra.mxu0 0.0
    %125 = vmatprep.subr.mxu0 0.0
    %126 = vmatpush1.msra.mxu0 0.0
    %127 = vmatprep.subr.mxu0 0.0
    %128 = vmatpush1.msra.mxu0 0.0
    %129 = vmatprep.subr.mxu0 0.0
    %130 = vmatpush1.msra.mxu0 0.0
    %131 = vmatprep.subr.mxu0 0.0
    %132 = vmatpush1.msra.mxu0 0.0
    %133 = vmatprep.subr.mxu0 0.0
    %134 = vmatpush1.msra.mxu0 0.0
    %135 = vmatprep.subr.mxu0 0.0
    %136 = vmatpush1.msra.mxu0 0.0
    %137 = vmatprep.subr.mxu0 0.0
    %138 = vmatpush1.msra.mxu0 0.0
    %139 = vmatprep.subr.mxu0 0.0
    %140 = vmatpush1.msra.mxu0 0.0
    %141 = vmatprep.subr.mxu0 0.0
    %142 = vmatpush1.msra.mxu0 0.0
    %143 = vmatprep.subr.mxu0 0.0
    %144 = vmatpush1.msra.mxu0 0.0
    %145 = vmatprep.subr.mxu0 0.0
    %146 = vmatpush1.msra.mxu0 0.0
    %147 = vmatprep.subr.mxu0 0.0
    %148 = vmatpush1.msra.mxu0 0.0
    %149 = vmatprep.subr.mxu0 0.0
    %150 = vmatpush1.msra.mxu0 0.0
    %151 = vmatprep.subr.mxu0 0.0
    %152 = vmatpush1.msra.mxu0 0.0
    %153 = vmatprep.subr.mxu0 0.0
    %154 = vmatpush1.msra.mxu0 0.0
    %155 = vmatprep.subr.mxu0 0.0
    %156 = vmatpush1.msra.mxu0 0.0
    %157 = vmatprep.subr.mxu0 0.0
    %158 = vmatpush1.msra.mxu0 0.0
    %159 = vmatprep.subr.mxu0 0.0
    %160 = vmatpush1.msra.mxu0 0.0
    %161 = vmatprep.subr.mxu0 0.0
    %162 = vmatpush1.msra.mxu0 0.0
    %163 = vmatprep.mubr.f32.mxu0 0.0
    %v164 = vand.u32 %v22, 4294901760
    %165 = vmatmul.mubr.f32.gmra.mrb[0].mxu0 %v164
    %v166 = vpop.f32.mrb[0].mxu0
    %v167 = vadd.f32 %v96, %v166
    %v168 = vpop.f32.mrb[0].mxu0
    %169 = vdwg.mxu0
    %170 = vmatprep.subr.mxu0 0.0
    %171 = vmatpush1.msra.mxu0 0.0
    %172 = vmatprep.subr.mxu0 0.0
    %173 = vmatpush1.msra.mxu0 0.0
    %174 = vmatprep.subr.mxu0 0.0
    %175 = vmatpush1.msra.mxu0 0.0
    %176 = vmatprep.subr.mxu0 0.0
    %177 = vmatpush1.msra.mxu0 0.0
    %178 = vmatprep.subr.mxu0 0.0
    %179 = vmatpush1.msra.mxu0 0.0
    %180 = vmatprep.subr.mxu0 0.0
    %181 = vmatpush1.msra.mxu0 0.0
    %182 = vmatprep.subr.mxu0 0.0
    %183 = vmatpush1.msra.mxu0 0.0
    %184 = vmatprep.subr.mxu0 0.0
    %185 = vmatpush1.msra.mxu0 0.0
    %186 = vmatprep.subr.mxu0 0.0
    %187 = vmatpush1.msra.mxu0 0.0
    %188 = vmatprep.subr.mxu0 0.0
    %189 = vmatpush1.msra.mxu0 0.0
    %190 = vmatprep.subr.mxu0 0.0
    %191 = vmatpush1.msra.mxu0 0.0
    %192 = vmatprep.subr.mxu0 0.0
    %193 = vmatpush1.msra.mxu0 0.0
    %194 = vmatprep.subr.mxu0 0.0
    %195 = vmatpush1.msra.mxu0 0.0
    %196 = vmatprep.subr.mxu0 0.0
    %197 = vmatpush1.msra.mxu0 0.0
    %198 = vmatprep.subr.mxu0 0.0
    %199 = vmatpush1.msra.mxu0 0.0
    %200 = vmatprep.subr.mxu0 0.0
    %201 = vmatpush1.msra.mxu0 0.0
    %202 = vmatprep.subr.mxu0 0.0
    %203 = vmatpush1.msra.mxu0 0.0
    %204 = vmatprep.subr.mxu0 0.0
    %205 = vmatpush1.msra.mxu0 0.0
    %206 = vmatprep.subr.mxu0 0.0
    %207 = vmatpush1.msra.mxu0 0.0
    %208 = vmatprep.subr.mxu0 0.0
    %209 = vmatpush1.msra.mxu0 0.0
    %210 = vmatprep.subr.mxu0 0.0
    %211 = vmatpush1.msra.mxu0 0.0
    %212 = vmatprep.subr.mxu0 0.0
    %213 = vmatpush1.msra.mxu0 0.0
    %214 = vmatprep.subr.mxu0 0.0
    %215 = vmatpush1.msra.mxu0 0.0
    %216 = vmatprep.subr.mxu0 0.0
    %217 = vmatpush1.msra.mxu0 0.0
    %218 = vmatprep.subr.mxu0 0.0
    %219 = vmatpush1.msra.mxu0 0.0
    %220 = vmatprep.subr.mxu0 0.0
    %221 = vmatpush1.msra.mxu0 0.0
    %222 = vmatprep.subr.mxu0 0.0
    %223 = vmatpush1.msra.mxu0 0.0
    %224 = vmatprep.subr.mxu0 0.0
    %225 = vmatpush1.msra.mxu0 0.0
    %226 = vmatprep.subr.mxu0 0.0
    %227 = vmatpush1.msra.mxu0 0.0
    %228 = vmatprep.subr.mxu0 0.0
    %229 = vmatpush1.msra.mxu0 0.0
    %230 = vmatprep.subr.mxu0 0.0
    %231 = vmatpush1.msra.mxu0 0.0
    %232 = vmatprep.subr.mxu0 0.0
    %233 = vmatpush1.msra.mxu0 0.0
    %234 = vmatprep.mubr.f32.mxu0 0.0
    %v235 = vand.u32 %v22, 4294901760
    %v236 = vsub.f32 %v22, %v235
    %237 = vmatmul.mubr.f32.gmra.mrb[0].mxu0 %v236
    %v238 = vpop.f32.mrb[0].mxu0
    %v239 = vadd.f32 %v167, %v238
    %v240 = vpop.f32.mrb[0].mxu0
    %241 = vdwg.mxu0
    %242 = vmatprep.subr.mxu0 0.0
    %243 = vmatpush1.msra.mxu0 1.0
    %244 = vmatprep.subr.mxu0 0.0
    %245 = vmatpush1.msra.mxu0 1.0
    %246 = vmatprep.subr.mxu0 0.0
    %247 = vmatpush1.msra.mxu0 0.0
    %248 = vmatprep.subr.mxu0 0.0
    %249 = vmatpush1.msra.mxu0 0.0
    %250 = vmatprep.subr.mxu0 0.0
    %251 = vmatpush1.msra.mxu0 0.0
    %252 = vmatprep.subr.mxu0 0.0
    %253 = vmatpush1.msra.mxu0 0.0
    %254 = vmatprep.subr.mxu0 0.0
    %255 = vmatpush1.msra.mxu0 0.0
    %256 = vmatprep.subr.mxu0 0.0
    %257 = vmatpush1.msra.mxu0 0.0
    %258 = vmatprep.subr.mxu0 0.0
    %259 = vmatpush1.msra.mxu0 0.0
    %260 = vmatprep.subr.mxu0 0.0
    %261 = vmatpush1.msra.mxu0 0.0
    %262 = vmatprep.subr.mxu0 0.0
    %263 = vmatpush1.msra.mxu0 0.0
    %264 = vmatprep.subr.mxu0 0.0
    %265 = vmatpush1.msra.mxu0 0.0
    %266 = vmatprep.subr.mxu0 0.0
    %267 = vmatpush1.msra.mxu0 0.0
    %268 = vmatprep.subr.mxu0 0.0
    %269 = vmatpush1.msra.mxu0 0.0
    %270 = vmatprep.subr.mxu0 0.0
    %271 = vmatpush1.msra.mxu0 0.0
    %272 = vmatprep.subr.mxu0 0.0
    %273 = vmatpush1.msra.mxu0 0.0
    %274 = vmatprep.subr.mxu0 0.0
    %275 = vmatpush1.msra.mxu0 0.0
    %276 = vmatprep.subr.mxu0 0.0
    %277 = vmatpush1.msra.mxu0 0.0
    %278 = vmatprep.subr.mxu0 0.0
    %279 = vmatpush1.msra.mxu0 0.0
    %280 = vmatprep.subr.mxu0 0.0
    %281 = vmatpush1.msra.mxu0 0.0
    %282 = vmatprep.subr.mxu0 0.0
    %283 = vmatpush1.msra.mxu0 0.0
    %284 = vmatprep.subr.mxu0 0.0
    %285 = vmatpush1.msra.mxu0 0.0
    %286 = vmatprep.subr.mxu0 0.0
    %287 = vmatpush1.msra.mxu0 0.0
    %288 = vmatprep.subr.mxu0 0.0
    %289 = vmatpush1.msra.mxu0 0.0
    %290 = vmatprep.subr.mxu0 0.0
    %291 = vmatpush1.msra.mxu0 0.0
    %292 = vmatprep.subr.mxu0 0.0
    %293 = vmatpush1.msra.mxu0 0.0
    %294 = vmatprep.subr.mxu0 0.0
    %295 = vmatpush1.msra.mxu0 0.0
    %296 = vmatprep.subr.mxu0 0.0
    %297 = vmatpush1.msra.mxu0 0.0
    %298 = vmatprep.subr.mxu0 0.0
    %299 = vmatpush1.msra.mxu0 0.0
    %300 = vmatprep.subr.mxu0 0.0
    %301 = vmatpush1.msra.mxu0 0.0
    %302 = vmatprep.subr.mxu0 0.0
    %303 = vmatpush1.msra.mxu0 0.0
    %304 = vmatprep.subr.mxu0 0.0
    %305 = vmatpush1.msra.mxu0 0.0
    %306 = vmatprep.mubr.f32.mxu0 0.0
    %v307 = vand.u32 %v22, 4294901760
    %v308 = vsub.f32 %v22, %v307
    %v309 = vand.u32 %v308, 4294901760
    %310 = vmatmul.mubr.f32.gmra.mrb[0].mxu0 %v309
    %v311 = vpop.f32.mrb[0].mxu0
    %v312 = vadd.f32 %v239, %v311
    %v313 = vpop.f32.mrb[0].mxu0
    %314 = vdwg.mxu0
    %315 = vmatprep.subr.mxu0 0.0
    %316 = vmatpush1.msra.mxu0 0.0
    %317 = vmatprep.subr.mxu0 0.0
    %318 = vmatpush1.msra.mxu0 0.0
    %319 = vmatprep.subr.mxu0 0.0
    %320 = vmatpush1.msra.mxu0 0.0
    %321 = vmatprep.subr.mxu0 0.0
    %322 = vmatpush1.msra.mxu0 0.0
    %323 = vmatprep.subr.mxu0 0.0
    %324 = vmatpush1.msra.mxu0 0.0
    %325 = vmatprep.subr.mxu0 0.0
    %326 = vmatpush1.msra.mxu0 0.0
    %327 = vmatprep.subr.mxu0 0.0
    %328 = vmatpush1.msra.mxu0 0.0
    %329 = vmatprep.subr.mxu0 0.0
    %330 = vmatpush1.msra.mxu0 0.0
    %331 = vmatprep.subr.mxu0 0.0
    %332 = vmatpush1.msra.mxu0 0.0
    %333 = vmatprep.subr.mxu0 0.0
    %334 = vmatpush1.msra.mxu0 0.0
    %335 = vmatprep.subr.mxu0 0.0
    %336 = vmatpush1.msra.mxu0 0.0
    %337 = vmatprep.subr.mxu0 0.0
    %338 = vmatpush1.msra.mxu0 0.0
    %339 = vmatprep.subr.mxu0 0.0
    %340 = vmatpush1.msra.mxu0 0.0
    %341 = vmatprep.subr.mxu0 0.0
    %342 = vmatpush1.msra.mxu0 0.0
    %343 = vmatprep.subr.mxu0 0.0
    %344 = vmatpush1.msra.mxu0 0.0
    %345 = vmatprep.subr.mxu0 0.0
    %346 = vmatpush1.msra.mxu0 0.0
    %347 = vmatprep.subr.mxu0 0.0
    %348 = vmatpush1.msra.mxu0 0.0
    %349 = vmatprep.subr.mxu0 0.0
    %350 = vmatpush1.msra.mxu0 0.0
    %351 = vmatprep.subr.mxu0 0.0
    %352 = vmatpush1.msra.mxu0 0.0
    %353 = vmatprep.subr.mxu0 0.0
    %354 = vmatpush1.msra.mxu0 0.0
    %355 = vmatprep.subr.mxu0 0.0
    %356 = vmatpush1.msra.mxu0 0.0
    %357 = vmatprep.subr.mxu0 0.0
    %358 = vmatpush1.msra.mxu0 0.0
    %359 = vmatprep.subr.mxu0 0.0
    %360 = vmatpush1.msra.mxu0 0.0
    %361 = vmatprep.subr.mxu0 0.0
    %362 = vmatpush1.msra.mxu0 0.0
    %363 = vmatprep.subr.mxu0 0.0
    %364 = vmatpush1.msra.mxu0 0.0
    %365 = vmatprep.subr.mxu0 0.0
    %366 = vmatpush1.msra.mxu0 0.0
    %367 = vmatprep.subr.mxu0 0.0
    %368 = vmatpush1.msra.mxu0 0.0
    %369 = vmatprep.subr.mxu0 0.0
    %370 = vmatpush1.msra.mxu0 0.0
    %371 = vmatprep.subr.mxu0 0.0
    %372 = vmatpush1.msra.mxu0 0.0
    %373 = vmatprep.subr.mxu0 0.0
    %374 = vmatpush1.msra.mxu0 0.0
    %375 = vmatprep.subr.mxu0 0.0
    %376 = vmatpush1.msra.mxu0 0.0
    %377 = vmatprep.subr.mxu0 0.0
    %378 = vmatpush1.msra.mxu0 0.0
    %379 = vmatprep.mubr.f32.mxu0 0.0
    %v380 = vand.u32 %v22, 4294901760
    %381 = vmatmul.mubr.f32.gmra.mrb[0].mxu0 %v380
    %v382 = vpop.f32.mrb[0].mxu0
    %v383 = vadd.f32 %v312, %v382
    %v384 = vpop.f32.mrb[0].mxu0
    %385 = vdwg.mxu0
    %386 = vmatprep.subr.mxu0 0.0
    %387 = vmatpush1.msra.mxu0 1.0
    %388 = vmatprep.subr.mxu0 0.0
    %389 = vmatpush1.msra.mxu0 1.0
    %390 = vmatprep.subr.mxu0 0.0
    %391 = vmatpush1.msra.mxu0 0.0
    %392 = vmatprep.subr.mxu0 0.0
    %393 = vmatpush1.msra.mxu0 0.0
    %394 = vmatprep.subr.mxu0 0.0
    %395 = vmatpush1.msra.mxu0 0.0
    %396 = vmatprep.subr.mxu0 0.0
    %397 = vmatpush1.msra.mxu0 0.0
    %398 = vmatprep.subr.mxu0 0.0
    %399 = vmatpush1.msra.mxu0 0.0
    %400 = vmatprep.subr.mxu0 0.0
    %401 = vmatpush1.msra.mxu0 0.0
    %402 = vmatprep.subr.mxu0 0.0
    %403 = vmatpush1.msra.mxu0 0.0
    %404 = vmatprep.subr.mxu0 0.0
    %405 = vmatpush1.msra.mxu0 0.0
    %406 = vmatprep.subr.mxu0 0.0
    %407 = vmatpush1.msra.mxu0 0.0
    %408 = vmatprep.subr.mxu0 0.0
    %409 = vmatpush1.msra.mxu0 0.0
    %410 = vmatprep.subr.mxu0 0.0
    %411 = vmatpush1.msra.mxu0 0.0
    %412 = vmatprep.subr.mxu0 0.0
    %413 = vmatpush1.msra.mxu0 0.0
    %414 = vmatprep.subr.mxu0 0.0
    %415 = vmatpush1.msra.mxu0 0.0
    %416 = vmatprep.subr.mxu0 0.0
    %417 = vmatpush1.msra.mxu0 0.0
    %418 = vmatprep.subr.mxu0 0.0
    %419 = vmatpush1.msra.mxu0 0.0
    %420 = vmatprep.subr.mxu0 0.0
    %421 = vmatpush1.msra.mxu0 0.0
    %422 = vmatprep.subr.mxu0 0.0
    %423 = vmatpush1.msra.mxu0 0.0
    %424 = vmatprep.subr.mxu0 0.0
    %425 = vmatpush1.msra.mxu0 0.0
    %426 = vmatprep.subr.mxu0 0.0
    %427 = vmatpush1.msra.mxu0 0.0
    %428 = vmatprep.subr.mxu0 0.0
    %429 = vmatpush1.msra.mxu0 0.0
    %430 = vmatprep.subr.mxu0 0.0
    %431 = vmatpush1.msra.mxu0 0.0
    %432 = vmatprep.subr.mxu0 0.0
    %433 = vmatpush1.msra.mxu0 0.0
    %434 = vmatprep.subr.mxu0 0.0
    %435 = vmatpush1.msra.mxu0 0.0
    %436 = vmatprep.subr.mxu0 0.0
    %437 = vmatpush1.msra.mxu0 0.0
    %438 = vmatprep.subr.mxu0 0.0
    %439 = vmatpush1.msra.mxu0 0.0
    %440 = vmatprep.subr.mxu0 0.0
    %441 = vmatpush1.msra.mxu0 0.0
    %442 = vmatprep.subr.mxu0 0.0
    %443 = vmatpush1.msra.mxu0 0.0
    %444 = vmatprep.subr.mxu0 0.0
    %445 = vmatpush1.msra.mxu0 0.0
    %446 = vmatprep.subr.mxu0 0.0
    %447 = vmatpush1.msra.mxu0 0.0
    %448 = vmatprep.subr.mxu0 0.0
    %449 = vmatpush1.msra.mxu0 0.0
    %450 = vmatprep.mubr.f32.mxu0 0.0
    %v451 = vand.u32 %v22, 4294901760
    %452 = vmatmul.mubr.f32.gmra.mrb[0].mxu0 %v451
    %v453 = vpop.f32.mrb[0].mxu0
    %v454 = vadd.f32 %v383, %v453
    %v455 = vpop.f32.mrb[0].mxu0
    %456 = vdwg.mxu0
    %v457 = vlog2.pop %v454
    %v458 = vmul.f32 %v457, 0.6931472
    %v459 = vlaneseq
    %v460 = vand.u32 %v459, 127
    %461 = vset.pattern.permute.xlu0 0
    %462 = vperm.xlu0 %461, %v13
    %v463 = vpop.permute.xlu0 %462
    %vm464 = vcmp.eq.s32.totalorder %v460, %v463
    %v465 = vsel %vm464, %v18, 0.0
    %v467 = vsel %vm14, %v465, 0
    %469 = vmatprep.subr.mxu0 0.0
    %470 = vmatpush1.msra.mxu0 1.0
    %471 = vmatprep.subr.mxu0 0.0
    %472 = vmatpush1.msra.mxu0 1.0
    %473 = vmatprep.subr.mxu0 0.0
    %474 = vmatpush1.msra.mxu0 0.0
    %475 = vmatprep.subr.mxu0 0.0
    %476 = vmatpush1.msra.mxu0 0.0
    %477 = vmatprep.subr.mxu0 0.0
    %478 = vmatpush1.msra.mxu0 0.0
    %479 = vmatprep.subr.mxu0 0.0
    %480 = vmatpush1.msra.mxu0 0.0
    %481 = vmatprep.subr.mxu0 0.0
    %482 = vmatpush1.msra.mxu0 0.0
    %483 = vmatprep.subr.mxu0 0.0
    %484 = vmatpush1.msra.mxu0 0.0
    %485 = vmatprep.subr.mxu0 0.0
    %486 = vmatpush1.msra.mxu0 0.0
    %487 = vmatprep.subr.mxu0 0.0
    %488 = vmatpush1.msra.mxu0 0.0
    %489 = vmatprep.subr.mxu0 0.0
    %490 = vmatpush1.msra.mxu0 0.0
    %491 = vmatprep.subr.mxu0 0.0
    %492 = vmatpush1.msra.mxu0 0.0
    %493 = vmatprep.subr.mxu0 0.0
    %494 = vmatpush1.msra.mxu0 0.0
    %495 = vmatprep.subr.mxu0 0.0
    %496 = vmatpush1.msra.mxu0 0.0
    %497 = vmatprep.subr.mxu0 0.0
    %498 = vmatpush1.msra.mxu0 0.0
    %499 = vmatprep.subr.mxu0 0.0
    %500 = vmatpush1.msra.mxu0 0.0
    %501 = vmatprep.subr.mxu0 0.0
    %502 = vmatpush1.msra.mxu0 0.0
    %503 = vmatprep.subr.mxu0 0.0
    %504 = vmatpush1.msra.mxu0 0.0
    %505 = vmatprep.subr.mxu0 0.0
    %506 = vmatpush1.msra.mxu0 0.0
    %507 = vmatprep.subr.mxu0 0.0
    %508 = vmatpush1.msra.mxu0 0.0
    %509 = vmatprep.subr.mxu0 0.0
    %510 = vmatpush1.msra.mxu0 0.0
    %511 = vmatprep.subr.mxu0 0.0
    %512 = vmatpush1.msra.mxu0 0.0
    %513 = vmatprep.subr.mxu0 0.0
    %514 = vmatpush1.msra.mxu0 0.0
    %515 = vmatprep.subr.mxu0 0.0
    %516 = vmatpush1.msra.mxu0 0.0
    %517 = vmatprep.subr.mxu0 0.0
    %518 = vmatpush1.msra.mxu0 0.0
    %519 = vmatprep.subr.mxu0 0.0
    %520 = vmatpush1.msra.mxu0 0.0
    %521 = vmatprep.subr.mxu0 0.0
    %522 = vmatpush1.msra.mxu0 0.0
    %523 = vmatprep.subr.mxu0 0.0
    %524 = vmatpush1.msra.mxu0 0.0
    %525 = vmatprep.subr.mxu0 0.0
    %526 = vmatpush1.msra.mxu0 0.0
    %527 = vmatprep.subr.mxu0 0.0
    %528 = vmatpush1.msra.mxu0 0.0
    %529 = vmatprep.subr.mxu0 0.0
    %530 = vmatpush1.msra.mxu0 0.0
    %531 = vmatprep.subr.mxu0 0.0
    %532 = vmatpush1.msra.mxu0 0.0
    %533 = vmatprep.mubr.f32.mxu0 0.0
    %v534 = vand.u32 %v467, 4294901760
    %v535 = vsub.f32 %v467, %v534
    %v536 = vand.u32 %v535, 4294901760
    %v537 = vsub.f32 %v535, %v536
    %v538 = vand.u32 %v537, 4294901760
    %539 = vmatmul.mubr.f32.gmra.mrb[0].mxu0 %v538
    %v540 = vpop.f32.mrb[0].mxu0
    %v541 = vadd.f32 0.0, %v540
    %v542 = vpop.f32.mrb[0].mxu0
    %543 = vdwg.mxu0
    %544 = vmatprep.subr.mxu0 0.0
    %545 = vmatpush1.msra.mxu0 0.0
    %546 = vmatprep.subr.mxu0 0.0
    %547 = vmatpush1.msra.mxu0 0.0
    %548 = vmatprep.subr.mxu0 0.0
    %549 = vmatpush1.msra.mxu0 0.0
    %550 = vmatprep.subr.mxu0 0.0
    %551 = vmatpush1.msra.mxu0 0.0
    %552 = vmatprep.subr.mxu0 0.0
    %553 = vmatpush1.msra.mxu0 0.0
    %554 = vmatprep.subr.mxu0 0.0
    %555 = vmatpush1.msra.mxu0 0.0
    %556 = vmatprep.subr.mxu0 0.0
    %557 = vmatpush1.msra.mxu0 0.0
    %558 = vmatprep.subr.mxu0 0.0
    %559 = vmatpush1.msra.mxu0 0.0
    %560 = vmatprep.subr.mxu0 0.0
    %561 = vmatpush1.msra.mxu0 0.0
    %562 = vmatprep.subr.mxu0 0.0
    %563 = vmatpush1.msra.mxu0 0.0
    %564 = vmatprep.subr.mxu0 0.0
    %565 = vmatpush1.msra.mxu0 0.0
    %566 = vmatprep.subr.mxu0 0.0
    %567 = vmatpush1.msra.mxu0 0.0
    %568 = vmatprep.subr.mxu0 0.0
    %569 = vmatpush1.msra.mxu0 0.0
    %570 = vmatprep.subr.mxu0 0.0
    %571 = vmatpush1.msra.mxu0 0.0
    %572 = vmatprep.subr.mxu0 0.0
    %573 = vmatpush1.msra.mxu0 0.0
    %574 = vmatprep.subr.mxu0 0.0
    %575 = vmatpush1.msra.mxu0 0.0
    %576 = vmatprep.subr.mxu0 0.0
    %577 = vmatpush1.msra.mxu0 0.0
    %578 = vmatprep.subr.mxu0 0.0
    %579 = vmatpush1.msra.mxu0 0.0
    %580 = vmatprep.subr.mxu0 0.0
    %581 = vmatpush1.msra.mxu0 0.0
    %582 = vmatprep.subr.mxu0 0.0
    %583 = vmatpush1.msra.mxu0 0.0
    %584 = vmatprep.subr.mxu0 0.0
    %585 = vmatpush1.msra.mxu0 0.0
    %586 = vmatprep.subr.mxu0 0.0
    %587 = vmatpush1.msra.mxu0 0.0
    %588 = vmatprep.subr.mxu0 0.0
    %589 = vmatpush1.msra.mxu0 0.0
    %590 = vmatprep.subr.mxu0 0.0
    %591 = vmatpush1.msra.mxu0 0.0
    %592 = vmatprep.subr.mxu0 0.0
    %593 = vmatpush1.msra.mxu0 0.0
    %594 = vmatprep.subr.mxu0 0.0
    %595 = vmatpush1.msra.mxu0 0.0
    %596 = vmatprep.subr.mxu0 0.0
    %597 = vmatpush1.msra.mxu0 0.0
    %598 = vmatprep.subr.mxu0 0.0
    %599 = vmatpush1.msra.mxu0 0.0
    %600 = vmatprep.subr.mxu0 0.0
    %601 = vmatpush1.msra.mxu0 0.0
    %602 = vmatprep.subr.mxu0 0.0
    %603 = vmatpush1.msra.mxu0 0.0
    %604 = vmatprep.subr.mxu0 0.0
    %605 = vmatpush1.msra.mxu0 0.0
    %606 = vmatprep.subr.mxu0 0.0
    %607 = vmatpush1.msra.mxu0 0.0
    %608 = vmatprep.mubr.f32.mxu0 0.0
    %v609 = vand.u32 %v467, 4294901760
    %610 = vmatmul.mubr.f32.gmra.mrb[0].mxu0 %v609
    %v611 = vpop.f32.mrb[0].mxu0
    %v612 = vadd.f32 %v541, %v611
    %v613 = vpop.f32.mrb[0].mxu0
    %614 = vdwg.mxu0
    %615 = vmatprep.subr.mxu0 0.0
    %616 = vmatpush1.msra.mxu0 0.0
    %617 = vmatprep.subr.mxu0 0.0
    %618 = vmatpush1.msra.mxu0 0.0
    %619 = vmatprep.subr.mxu0 0.0
    %620 = vmatpush1.msra.mxu0 0.0
    %621 = vmatprep.subr.mxu0 0.0
    %622 = vmatpush1.msra.mxu0 0.0
    %623 = vmatprep.subr.mxu0 0.0
    %624 = vmatpush1.msra.mxu0 0.0
    %625 = vmatprep.subr.mxu0 0.0
    %626 = vmatpush1.msra.mxu0 0.0
    %627 = vmatprep.subr.mxu0 0.0
    %628 = vmatpush1.msra.mxu0 0.0
    %629 = vmatprep.subr.mxu0 0.0
    %630 = vmatpush1.msra.mxu0 0.0
    %631 = vmatprep.subr.mxu0 0.0
    %632 = vmatpush1.msra.mxu0 0.0
    %633 = vmatprep.subr.mxu0 0.0
    %634 = vmatpush1.msra.mxu0 0.0
    %635 = vmatprep.subr.mxu0 0.0
    %636 = vmatpush1.msra.mxu0 0.0
    %637 = vmatprep.subr.mxu0 0.0
    %638 = vmatpush1.msra.mxu0 0.0
    %639 = vmatprep.subr.mxu0 0.0
    %640 = vmatpush1.msra.mxu0 0.0
    %641 = vmatprep.subr.mxu0 0.0
    %642 = vmatpush1.msra.mxu0 0.0
    %643 = vmatprep.subr.mxu0 0.0
    %644 = vmatpush1.msra.mxu0 0.0
    %645 = vmatprep.subr.mxu0 0.0
    %646 = vmatpush1.msra.mxu0 0.0
    %647 = vmatprep.subr.mxu0 0.0
    %648 = vmatpush1.msra.mxu0 0.0
    %649 = vmatprep.subr.mxu0 0.0
    %650 = vmatpush1.msra.mxu0 0.0
    %651 = vmatprep.subr.mxu0 0.0
    %652 = vmatpush1.msra.mxu0 0.0
    %653 = vmatprep.subr.mxu0 0.0
    %654 = vmatpush1.msra.mxu0 0.0
    %655 = vmatprep.subr.mxu0 0.0
    %656 = vmatpush1.msra.mxu0 0.0
    %657 = vmatprep.subr.mxu0 0.0
    %658 = vmatpush1.msra.mxu0 0.0
    %659 = vmatprep.subr.mxu0 0.0
    %660 = vmatpush1.msra.mxu0 0.0
    %661 = vmatprep.subr.mxu0 0.0
    %662 = vmatpush1.msra.mxu0 0.0
    %663 = vmatprep.subr.mxu0 0.0
    %664 = vmatpush1.msra.mxu0 0.0
    %665 = vmatprep.subr.mxu0 0.0
    %666 = vmatpush1.msra.mxu0 0.0
    %667 = vmatprep.subr.mxu0 0.0
    %668 = vmatpush1.msra.mxu0 0.0
    %669 = vmatprep.subr.mxu0 0.0
    %670 = vmatpush1.msra.mxu0 0.0
    %671 = vmatprep.subr.mxu0 0.0
    %672 = vmatpush1.msra.mxu0 0.0
    %673 = vmatprep.subr.mxu0 0.0
    %674 = vmatpush1.msra.mxu0 0.0
    %675 = vmatprep.subr.mxu0 0.0
    %676 = vmatpush1.msra.mxu0 0.0
    %677 = vmatprep.subr.mxu0 0.0
    %678 = vmatpush1.msra.mxu0 0.0
    %679 = vmatprep.mubr.f32.mxu0 0.0
    %v680 = vand.u32 %v467, 4294901760
    %v681 = vsub.f32 %v467, %v680
    %682 = vmatmul.mubr.f32.gmra.mrb[0].mxu0 %v681
    %v683 = vpop.f32.mrb[0].mxu0
    %v684 = vadd.f32 %v612, %v683
    %v685 = vpop.f32.mrb[0].mxu0
    %686 = vdwg.mxu0
    %687 = vmatprep.subr.mxu0 0.0
    %688 = vmatpush1.msra.mxu0 1.0
    %689 = vmatprep.subr.mxu0 0.0
    %690 = vmatpush1.msra.mxu0 1.0
    %691 = vmatprep.subr.mxu0 0.0
    %692 = vmatpush1.msra.mxu0 0.0
    %693 = vmatprep.subr.mxu0 0.0
    %694 = vmatpush1.msra.mxu0 0.0
    %695 = vmatprep.subr.mxu0 0.0
    %696 = vmatpush1.msra.mxu0 0.0
    %697 = vmatprep.subr.mxu0 0.0
    %698 = vmatpush1.msra.mxu0 0.0
    %699 = vmatprep.subr.mxu0 0.0
    %700 = vmatpush1.msra.mxu0 0.0
    %701 = vmatprep.subr.mxu0 0.0
    %702 = vmatpush1.msra.mxu0 0.0
    %703 = vmatprep.subr.mxu0 0.0
    %704 = vmatpush1.msra.mxu0 0.0
    %705 = vmatprep.subr.mxu0 0.0
    %706 = vmatpush1.msra.mxu0 0.0
    %707 = vmatprep.subr.mxu0 0.0
    %708 = vmatpush1.msra.mxu0 0.0
    %709 = vmatprep.subr.mxu0 0.0
    %710 = vmatpush1.msra.mxu0 0.0
    %711 = vmatprep.subr.mxu0 0.0
    %712 = vmatpush1.msra.mxu0 0.0
    %713 = vmatprep.subr.mxu0 0.0
    %714 = vmatpush1.msra.mxu0 0.0
    %715 = vmatprep.subr.mxu0 0.0
    %716 = vmatpush1.msra.mxu0 0.0
    %717 = vmatprep.subr.mxu0 0.0
    %718 = vmatpush1.msra.mxu0 0.0
    %719 = vmatprep.subr.mxu0 0.0
    %720 = vmatpush1.msra.mxu0 0.0
    %721 = vmatprep.subr.mxu0 0.0
    %722 = vmatpush1.msra.mxu0 0.0
    %723 = vmatprep.subr.mxu0 0.0
    %724 = vmatpush1.msra.mxu0 0.0
    %725 = vmatprep.subr.mxu0 0.0
    %726 = vmatpush1.msra.mxu0 0.0
    %727 = vmatprep.subr.mxu0 0.0
    %728 = vmatpush1.msra.mxu0 0.0
    %729 = vmatprep.subr.mxu0 0.0
    %730 = vmatpush1.msra.mxu0 0.0
    %731 = vmatprep.subr.mxu0 0.0
    %732 = vmatpush1.msra.mxu0 0.0
    %733 = vmatprep.subr.mxu0 0.0
    %734 = vmatpush1.msra.mxu0 0.0
    %735 = vmatprep.subr.mxu0 0.0
    %736 = vmatpush1.msra.mxu0 0.0
    %737 = vmatprep.subr.mxu0 0.0
    %738 = vmatpush1.msra.mxu0 0.0
    %739 = vmatprep.subr.mxu0 0.0
    %740 = vmatpush1.msra.mxu0 0.0
    %741 = vmatprep.subr.mxu0 0.0
    %742 = vmatpush1.msra.mxu0 0.0
    %743 = vmatprep.subr.mxu0 0.0
    %744 = vmatpush1.msra.mxu0 0.0
    %745 = vmatprep.subr.mxu0 0.0
    %746 = vmatpush1.msra.mxu0 0.0
    %747 = vmatprep.subr.mxu0 0.0
    %748 = vmatpush1.msra.mxu0 0.0
    %749 = vmatprep.subr.mxu0 0.0
    %750 = vmatpush1.msra.mxu0 0.0
    %751 = vmatprep.mubr.f32.mxu0 0.0
    %v752 = vand.u32 %v467, 4294901760
    %v753 = vsub.f32 %v467, %v752
    %v754 = vand.u32 %v753, 4294901760
    %755 = vmatmul.mubr.f32.gmra.mrb[0].mxu0 %v754
    %v756 = vpop.f32.mrb[0].mxu0
    %v757 = vadd.f32 %v684, %v756
    %v758 = vpop.f32.mrb[0].mxu0
    %759 = vdwg.mxu0
    %760 = vmatprep.subr.mxu0 0.0
    %761 = vmatpush1.msra.mxu0 0.0
    %762 = vmatprep.subr.mxu0 0.0
    %763 = vmatpush1.msra.mxu0 0.0
    %764 = vmatprep.subr.mxu0 0.0
    %765 = vmatpush1.msra.mxu0 0.0
    %766 = vmatprep.subr.mxu0 0.0
    %767 = vmatpush1.msra.mxu0 0.0
    %768 = vmatprep.subr.mxu0 0.0
    %769 = vmatpush1.msra.mxu0 0.0
    %770 = vmatprep.subr.mxu0 0.0
    %771 = vmatpush1.msra.mxu0 0.0
    %772 = vmatprep.subr.mxu0 0.0
    %773 = vmatpush1.msra.mxu0 0.0
    %774 = vmatprep.subr.mxu0 0.0
    %775 = vmatpush1.msra.mxu0 0.0
    %776 = vmatprep.subr.mxu0 0.0
    %777 = vmatpush1.msra.mxu0 0.0
    %778 = vmatprep.subr.mxu0 0.0
    %779 = vmatpush1.msra.mxu0 0.0
    %780 = vmatprep.subr.mxu0 0.0
    %781 = vmatpush1.msra.mxu0 0.0
    %782 = vmatprep.subr.mxu0 0.0
    %783 = vmatpush1.msra.mxu0 0.0
    %784 = vmatprep.subr.mxu0 0.0
    %785 = vmatpush1.msra.mxu0 0.0
    %786 = vmatprep.subr.mxu0 0.0
    %787 = vmatpush1.msra.mxu0 0.0
    %788 = vmatprep.subr.mxu0 0.0
    %789 = vmatpush1.msra.mxu0 0.0
    %790 = vmatprep.subr.mxu0 0.0
    %791 = vmatpush1.msra.mxu0 0.0
    %792 = vmatprep.subr.mxu0 0.0
    %793 = vmatpush1.msra.mxu0 0.0
    %794 = vmatprep.subr.mxu0 0.0
    %795 = vmatpush1.msra.mxu0 0.0
    %796 = vmatprep.subr.mxu0 0.0
    %797 = vmatpush1.msra.mxu0 0.0
    %798 = vmatprep.subr.mxu0 0.0
    %799 = vmatpush1.msra.mxu0 0.0
    %800 = vmatprep.subr.mxu0 0.0
    %801 = vmatpush1.msra.mxu0 0.0
    %802 = vmatprep.subr.mxu0 0.0
    %803 = vmatpush1.msra.mxu0 0.0
    %804 = vmatprep.subr.mxu0 0.0
    %805 = vmatpush1.msra.mxu0 0.0
    %806 = vmatprep.subr.mxu0 0.0
    %807 = vmatpush1.msra.mxu0 0.0
    %808 = vmatprep.subr.mxu0 0.0
    %809 = vmatpush1.msra.mxu0 0.0
    %810 = vmatprep.subr.mxu0 0.0
    %811 = vmatpush1.msra.mxu0 0.0
    %812 = vmatprep.subr.mxu0 0.0
    %813 = vmatpush1.msra.mxu0 0.0
    %814 = vmatprep.subr.mxu0 0.0
    %815 = vmatpush1.msra.mxu0 0.0
    %816 = vmatprep.subr.mxu0 0.0
    %817 = vmatpush1.msra.mxu0 0.0
    %818 = vmatprep.subr.mxu0 0.0
    %819 = vmatpush1.msra.mxu0 0.0
    %820 = vmatprep.subr.mxu0 0.0
    %821 = vmatpush1.msra.mxu0 0.0
    %822 = vmatprep.subr.mxu0 0.0
    %823 = vmatpush1.msra.mxu0 0.0
    %824 = vmatprep.mubr.f32.mxu0 0.0
    %v825 = vand.u32 %v467, 4294901760
    %826 = vmatmul.mubr.f32.gmra.mrb[0].mxu0 %v825
    %v827 = vpop.f32.mrb[0].mxu0
    %v828 = vadd.f32 %v757, %v827
    %v829 = vpop.f32.mrb[0].mxu0
    %830 = vdwg.mxu0
    %831 = vmatprep.subr.mxu0 0.0
    %832 = vmatpush1.msra.mxu0 1.0
    %833 = vmatprep.subr.mxu0 0.0
    %834 = vmatpush1.msra.mxu0 1.0
    %835 = vmatprep.subr.mxu0 0.0
    %836 = vmatpush1.msra.mxu0 0.0
    %837 = vmatprep.subr.mxu0 0.0
    %838 = vmatpush1.msra.mxu0 0.0
    %839 = vmatprep.subr.mxu0 0.0
    %840 = vmatpush1.msra.mxu0 0.0
    %841 = vmatprep.subr.mxu0 0.0
    %842 = vmatpush1.msra.mxu0 0.0
    %843 = vmatprep.subr.mxu0 0.0
    %844 = vmatpush1.msra.mxu0 0.0
    %845 = vmatprep.subr.mxu0 0.0
    %846 = vmatpush1.msra.mxu0 0.0
    %847 = vmatprep.subr.mxu0 0.0
    %848 = vmatpush1.msra.mxu0 0.0
    %849 = vmatprep.subr.mxu0 0.0
    %850 = vmatpush1.msra.mxu0 0.0
    %851 = vmatprep.subr.mxu0 0.0
    %852 = vmatpush1.msra.mxu0 0.0
    %853 = vmatprep.subr.mxu0 0.0
    %854 = vmatpush1.msra.mxu0 0.0
    %855 = vmatprep.subr.mxu0 0.0
    %856 = vmatpush1.msra.mxu0 0.0
    %857 = vmatprep.subr.mxu0 0.0
    %858 = vmatpush1.msra.mxu0 0.0
    %859 = vmatprep.subr.mxu0 0.0
    %860 = vmatpush1.msra.mxu0 0.0
    %861 = vmatprep.subr.mxu0 0.0
    %862 = vmatpush1.msra.mxu0 0.0
    %863 = vmatprep.subr.mxu0 0.0
    %864 = vmatpush1.msra.mxu0 0.0
    %865 = vmatprep.subr.mxu0 0.0
    %866 = vmatpush1.msra.mxu0 0.0
    %867 = vmatprep.subr.mxu0 0.0
    %868 = vmatpush1.msra.mxu0 0.0
    %869 = vmatprep.subr.mxu0 0.0
    %870 = vmatpush1.msra.mxu0 0.0
    %871 = vmatprep.subr.mxu0 0.0
    %872 = vmatpush1.msra.mxu0 0.0
    %873 = vmatprep.subr.mxu0 0.0
    %874 = vmatpush1.msra.mxu0 0.0
    %875 = vmatprep.subr.mxu0 0.0
    %876 = vmatpush1.msra.mxu0 0.0
    %877 = vmatprep.subr.mxu0 0.0
    %878 = vmatpush1.msra.mxu0 0.0
    %879 = vmatprep.subr.mxu0 0.0
    %880 = vmatpush1.msra.mxu0 0.0
    %881 = vmatprep.subr.mxu0 0.0
    %882 = vmatpush1.msra.mxu0 0.0
    %883 = vmatprep.subr.mxu0 0.0
    %884 = vmatpush1.msra.mxu0 0.0
    %885 = vmatprep.subr.mxu0 0.0
    %886 = vmatpush1.msra.mxu0 0.0
    %887 = vmatprep.subr.mxu0 0.0
    %888 = vmatpush1.msra.mxu0 0.0
    %889 = vmatprep.subr.mxu0 0.0
    %890 = vmatpush1.msra.mxu0 0.0
    %891 = vmatprep.subr.mxu0 0.0
    %892 = vmatpush1.msra.mxu0 0.0
    %893 = vmatprep.subr.mxu0 0.0
    %894 = vmatpush1.msra.mxu0 0.0
    %895 = vmatprep.mubr.f32.mxu0 0.0
    %v896 = vand.u32 %v467, 4294901760
    %897 = vmatmul.mubr.f32.gmra.mrb[0].mxu0 %v896
    %v898 = vpop.f32.mrb[0].mxu0
    %v899 = vadd.f32 %v828, %v898
    %v900 = vpop.f32.mrb[0].mxu0
    %901 = vdwg.mxu0
    %v902 = vsub.f32 %v899, %v458
    %v903 = vmul.f32 %v902, 1.442695
    %v904 = vpow.pop %v903
    %v905 = vsub.f32 1.0, %v904
    %v906 = vmax.f32 %v905, 0.0
    %v907 = vmul.f32 %v906, %v906
    %v908 = vmul.f32 %v907, -1.0
    %v909 = vmul.f32 %v908, %v902
    %v910 = vmul.f32 %v909, 0.5
    %s911 = smul.u32 0, 8
    %v912 = vlaneseq
    %v913 = vshrl.u32 %v912, 7
    %v914 = vstv %s911
    %v915 = vadd.s32 %v914, %v913
    %vm916 = vcmp.ne.s32.totalorder %v13, 4294967196
    %vm917 = vcmp.lt.s32.totalorder %v915, 8
    %vm918 = vmand %vm916, %vm917
    %v919 = vsel %vm918, %v910, 0.0
    %vm920 = vcmask 7168
    %v921 = vsel %vm920, %v919, 0.0
    %922 = vadd.xlane.f32.xlu0 %v921
    %v923 = vpop.xlane.xlu0 %922
    %v924 = vrot.slane %v923, 4
    %v925 = vadd.f32 %v923, %v924
    %v926 = vrot.slane %v925, 2
    %v927 = vadd.f32 %v925, %v926
    %v928 = vrot.slane %v927, 1
    %v929 = vadd.f32 %v927, %v928
    %s930 = vtos %v929
    %v931 = vstv %s930
    %932 = vst [vmem:[#allocation2] sm:$0xff] %v931
    // Predicated region
    $region10: #{tpu_custom_call.1} parent=1 // pred_check
      _
    $region11: #{tpu_custom_call.1} parent=1 // pred_check_branch
      %934 = sbr.rel (0) target = $region13
    $region12: #{tpu_custom_call.1} parent=1 // pred_region
      %s936 = ssub.s32 128, 128
      %937 = vsyncadd [#allocation3], %s936
      %s939 = sshll.u32 [#allocation2], 4
      %s940 = int_to_ptr.vmem [resolvable:$true] %s939
      %942 = dma.vmem_to_hbm [thread:$0]  %s940, 128, %s2, [#allocation3]
    $region13: #{tpu_custom_call.1} parent=1 // pred_fallthru
      _
    // Predicated region
    $region14: #{tpu_custom_call.1} parent=1 // pred_check
      _
    $region15: #{tpu_custom_call.1} parent=1 // pred_check_branch
      %944 = sbr.rel (0) target = $region17
    $region16: #{tpu_custom_call.1} parent=1 // pred_region
      %945 = dma.done [#allocation3], 128
    $region17: #{tpu_custom_call.1} parent=1 // pred_fallthru
      _
    %946 = vsyncpa [#allocation3], 1

</llo_original>
